<compile_context>
chip_gen: v7x
topology: tpu7x:2x2x1
jax: 0.10.0
libtpu: 0.0.40
codegen_flags: <defaults>
</compile_context>

<pallas_src>
import functools

import jax
import jax.numpy as jnp
from jax.experimental import pallas as pl
from jax.experimental.pallas import tpu as pltpu


# ----------------------------------------------------------------------------
# Fused kernel: triplet loss (step 0 only) + grid-tiled MSE reduction
# ----------------------------------------------------------------------------
def _fused_kernel(feat_ref, x_ref, xp_ref, supcon_ref, mse_ref, acc_ref, *,
                  margin, pass_size, n_rows, tile_rows, numel, need_mask):
    step = pl.program_id(0)

    # ---- MSE partial sum over this row tile (every grid step) ----
    d = x_ref[...].astype(jnp.float32) - xp_ref[...].astype(jnp.float32)
    sq = d * d
    if need_mask:
        # Last tile may run past n_rows -> garbage rows; mask them out.
        row_ids = step * tile_rows + jax.lax.broadcasted_iota(
            jnp.int32, sq.shape, 0)
        sq = jnp.where(row_ids < n_rows, sq, 0.0)
    partial = jnp.sum(jnp.sum(sq, axis=1, keepdims=True),
                      axis=0, keepdims=True)            # (1, 1)

    @pl.when(step == 0)
    def _first_step():
        # Initialize the running MSE accumulator (no zeros_like const needed).
        acc_ref[...] = partial

        # ---- triplet loss on the resident (3, pass_size, D) features block
        a = feat_ref[0].astype(jnp.float32)             # (pass_size, D)
        p = feat_ref[1].astype(jnp.float32)
        n = feat_ref[2].astype(jnp.float32)
        d_ap = a - p
        d_an = a - n
        pos_norm = jnp.sqrt(jnp.sum(d_ap * d_ap, axis=1, keepdims=True))
        neg_norm = jnp.sqrt(jnp.sum(d_an * d_an, axis=1, keepdims=True))
        pos_l = jnp.maximum(1e-10, pos_norm)
        neg_l = jnp.maximum(0.0, margin - neg_norm)
        per_row = pos_l + neg_l                         # (pass_size, 1)
        supcon_ref[...] = (jnp.sum(per_row, axis=0, keepdims=True)
                           * (1.0 / pass_size))

    @pl.when(step > 0)
    def _accumulate():
        acc_ref[...] = acc_ref[...] + partial

    @pl.when(step == pl.num_programs(0) - 1)
    def _finalize():
        mse_ref[...] = acc_ref[...] * (1.0 / numel)


# ----------------------------------------------------------------------------
# Wrapper
# ----------------------------------------------------------------------------
def _choose_tile_rows(n_rows, bytes_per_row,
                      target_tile_bytes=4 * 1024 * 1024):
    """Largest row tile within the per-buffer byte budget, respecting the
    (8, 128) tiling rule (rows must be a multiple of 8 unless full)."""
    tile = max(1, target_tile_bytes // max(1, bytes_per_row))
    if tile >= n_rows:
        return n_rows
    tile = max(8, (tile // 8) * 8)
    return min(tile, n_rows)


def triplet_mse_loss(cae_lambda, x, x_prime, features, labels=None,
                     margin=10.0, weight=None, split=None, reduce="mean",
                     max_tile_bytes=4 * 1024 * 1024):
    """Pallas version of TripletMSELoss.forward (reduce='mean', weight=None)."""
    assert reduce == "mean", "only reduce='mean' is implemented"
    assert weight is None, "weight path not implemented"
    assert x.shape == x_prime.shape

    bsz, feat_dim = features.shape
    pass_size = bsz // 3
    assert pass_size > 0
    if bsz != 3 * pass_size:
        features = features[: 3 * pass_size]
    feat3 = features.reshape(3, pass_size, feat_dim)    # free (contiguous)

    n_rows = x.shape[0]
    m = 1
    for s in x.shape[1:]:
        m *= s
    x2 = x.reshape(n_rows, m)
    xp2 = x_prime.reshape(n_rows, m)
    numel = n_rows * m

    bytes_per_row = m * x2.dtype.itemsize
    tile_rows = _choose_tile_rows(n_rows, bytes_per_row, max_tile_bytes)
    grid_steps = -(-n_rows // tile_rows)                # cdiv
    need_mask = (n_rows % tile_rows) != 0

    kernel = functools.partial(
        _fused_kernel,
        margin=float(margin), pass_size=pass_size, n_rows=n_rows,
        tile_rows=tile_rows, numel=numel, need_mask=need_mask)

    supcon, mse = pl.pallas_call(
        kernel,
        out_shape=(jax.ShapeDtypeStruct((1, 1), jnp.float32),
                   jax.ShapeDtypeStruct((1, 1), jnp.float32)),
        grid_spec=pltpu.PrefetchScalarGridSpec(
            num_scalar_prefetch=0,
            grid=(grid_steps,),
            in_specs=[
                # features: one resident block (constant index across grid)
                pl.BlockSpec((3, pass_size, feat_dim), lambda i: (0, 0, 0)),
                # x / x_prime: pipelined row tiles
                pl.BlockSpec((tile_rows, m), lambda i: (i, 0)),
                pl.BlockSpec((tile_rows, m), lambda i: (i, 0)),
            ],
            out_specs=[
                pl.BlockSpec((1, 1), lambda i: (0, 0)),
                pl.BlockSpec((1, 1), lambda i: (0, 0)),
            ],
            scratch_shapes=[pltpu.VMEM((1, 1), jnp.float32)],
        ),
        compiler_params=pltpu.CompilerParams(
            dimension_semantics=("arbitrary",),
            vmem_limit_bytes=32 * 1024 * 1024),
    )(feat3, x2, xp2)

    supcon = supcon[0, 0]
    mse = mse[0, 0]
    loss = cae_lambda * supcon + mse
    return loss, supcon, mse


# ----------------------------------------------------------------------------
# Pure-JAX reference (for sanity check)
# ----------------------------------------------------------------------------
def _reference(cae_lambda, x, x_prime, features, margin=10.0):
    bsz = features.shape[0]
    ps = bsz // 3
    a, p, n = features[:ps], features[ps:2 * ps], features[2 * ps:3 * ps]
    pos = jnp.maximum(1e-10, jnp.linalg.norm(a - p, ord=2, axis=1))
    neg = jnp.maximum(0.0, margin - jnp.linalg.norm(a - n, ord=2, axis=1))
    supcon = jnp.mean(pos + neg)
    mse = jnp.mean((x - x_prime) ** 2)
    return cae_lambda * supcon + mse, supcon, mse


if __name__ == "__main__":
    key = jax.random.PRNGKey(0)
    k1, k2, k3, k4, k5 = jax.random.split(key, 5)

    # Small shapes consistent with the module:
    #   x, x_prime: NCHW autoencoder input / reconstruction
    #   features:   (bsz, feature_dim), bsz divisible by 3
    x = jax.random.normal(k1, (2, 4, 16, 16), dtype=jnp.float32)
    x_prime = jax.random.normal(k2, (2, 4, 16, 16), dtype=jnp.float32)
    features = jax.random.normal(k3, (12, 32), dtype=jnp.float32)
    cae_lambda = jnp.float32(0.5)
    margin = 10.0

    loss, supcon, mse = triplet_mse_loss(cae_lambda, x, x_prime, features,
                                         margin=margin)
    jax.block_until_ready((loss, supcon, mse))

    ref_loss, ref_sup, ref_mse = _reference(cae_lambda, x, x_prime, features,
                                            margin=margin)
    assert jnp.allclose(loss, ref_loss, rtol=1e-5, atol=1e-5)
    assert jnp.allclose(supcon, ref_sup, rtol=1e-5, atol=1e-5)
    assert jnp.allclose(mse, ref_mse, rtol=1e-5, atol=1e-5)

    # Second check: force a multi-step grid + partial last tile (masking path)
    # by shrinking the per-buffer tile budget.
    x_b = jax.random.normal(k4, (10, 4, 16, 16), dtype=jnp.float32)
    xp_b = jax.random.normal(k5, (10, 4, 16, 16), dtype=jnp.float32)
    loss_b, sup_b, mse_b = triplet_mse_loss(cae_lambda, x_b, xp_b, features,
                                            margin=margin,
                                            max_tile_bytes=8 * 4096)
    jax.block_until_ready((loss_b, sup_b, mse_b))
    rl, rs, rm = _reference(cae_lambda, x_b, xp_b, features, margin=margin)
    assert jnp.allclose(loss_b, rl, rtol=1e-5, atol=1e-5)
    assert jnp.allclose(sup_b, rs, rtol=1e-5, atol=1e-5)
    assert jnp.allclose(mse_b, rm, rtol=1e-5, atol=1e-5)

    print("KERNEL_OK")
</pallas_src>

<mosaic_0001>
module attributes {stable_mosaic.version = 11 : i64} {
  func.func @_fused_kernel(%arg0: i32, %arg1: memref<3x4x32xf32, #tpu.memory_space<vmem>>, %arg2: memref<2x1024xf32, #tpu.memory_space<vmem>>, %arg3: memref<2x1024xf32, #tpu.memory_space<vmem>>, %arg4: memref<1x1xf32, #tpu.memory_space<vmem>>, %arg5: memref<1x1xf32, #tpu.memory_space<vmem>>, %arg6: memref<1x1xf32, #tpu.memory_space<vmem>>) attributes {dimension_semantics = [#tpu.dimension_semantics<arbitrary>], iteration_bounds = array<i64: 1>, scalar_prefetch = 0 : i64, scratch_operands = 1 : i64, tpu.core_type = #tpu.core_type<tc>, window_params = [{pipeline_mode = #tpu.pipeline_mode<synchronous>, transform_indices = @transform_0, window_bounds = array<i64: 3, 4, 32>}, {transform_indices = @transform_1, window_bounds = array<i64: 2, 1024>}, {transform_indices = @transform_2, window_bounds = array<i64: 2, 1024>}, {pipeline_mode = #tpu.pipeline_mode<synchronous>, transform_indices = @transform_3, window_bounds = array<i64: 1, 1>}, {pipeline_mode = #tpu.pipeline_mode<synchronous>, transform_indices = @transform_4, window_bounds = array<i64: 1, 1>}]} {
    %c0 = arith.constant 0 : index
    %c0_0 = arith.constant 0 : index
    %0 = vector.load %arg2[%c0, %c0_0] : memref<2x1024xf32, #tpu.memory_space<vmem>>, vector<2x1024xf32>
    %c0_1 = arith.constant 0 : index
    %c0_2 = arith.constant 0 : index
    %1 = vector.load %arg3[%c0_1, %c0_2] : memref<2x1024xf32, #tpu.memory_space<vmem>>, vector<2x1024xf32>
    %2 = arith.subf %0, %1 : vector<2x1024xf32>
    %3 = arith.mulf %2, %2 : vector<2x1024xf32>
    %cst = arith.constant dense<0.000000e+00> : vector<2xf32>
    %4 = vector.multi_reduction <add>, %3, %cst [1] : vector<2x1024xf32> to vector<2xf32>
    %5 = vector.shape_cast %4 : vector<2xf32> to vector<2x1xf32>
    %cst_3 = arith.constant dense<0.000000e+00> : vector<1xf32>
    %6 = vector.multi_reduction <add>, %5, %cst_3 [0] : vector<2x1xf32> to vector<1xf32>
    %7 = vector.shape_cast %6 : vector<1xf32> to vector<1x1xf32>
    %c0_i32 = arith.constant 0 : i32
    %8 = arith.cmpi eq, %arg0, %c0_i32 : i32
    %9 = arith.extui %8 : i1 to i32
    %c0_i32_4 = arith.constant 0 : i32
    %10 = arith.cmpi ne, %9, %c0_i32_4 : i32
    scf.if %10 {
      %c0_9 = arith.constant 0 : index
      %c0_10 = arith.constant 0 : index
      %17 = vector.load %arg6[%c0_9, %c0_10] : memref<1x1xf32, #tpu.memory_space<vmem>>, vector<1x1xf32>
      tpu.vector_store %arg6[%c0_9, %c0_10], %7 {strides = array<i32>} : memref<1x1xf32, #tpu.memory_space<vmem>>, vector<1x1xf32>,
      %c0_11 = arith.constant 0 : index
      %c0_12 = arith.constant 0 : index
      %c0_13 = arith.constant 0 : index
      %18 = vector.load %arg1[%c0_11, %c0_12, %c0_13] : memref<3x4x32xf32, #tpu.memory_space<vmem>>, vector<1x4x32xf32>
      %19 = vector.shape_cast %18 : vector<1x4x32xf32> to vector<4x32xf32>
      %c1 = arith.constant 1 : index
      %c0_14 = arith.constant 0 : index
      %c0_15 = arith.constant 0 : index
      %20 = vector.load %arg1[%c1, %c0_14, %c0_15] : memref<3x4x32xf32, #tpu.memory_space<vmem>>, vector<1x4x32xf32>
      %21 = vector.shape_cast %20 : vector<1x4x32xf32> to vector<4x32xf32>
      %c2 = arith.constant 2 : index
      %c0_16 = arith.constant 0 : index
      %c0_17 = arith.constant 0 : index
      %22 = vector.load %arg1[%c2, %c0_16, %c0_17] : memref<3x4x32xf32, #tpu.memory_space<vmem>>, vector<1x4x32xf32>
      %23 = vector.shape_cast %22 : vector<1x4x32xf32> to vector<4x32xf32>
      %24 = arith.subf %19, %21 : vector<4x32xf32>
      %25 = arith.subf %19, %23 : vector<4x32xf32>
      %26 = arith.mulf %24, %24 : vector<4x32xf32>
      %cst_18 = arith.constant dense<0.000000e+00> : vector<4xf32>
      %27 = vector.multi_reduction <add>, %26, %cst_18 [1] : vector<4x32xf32> to vector<4xf32>
      %28 = vector.shape_cast %27 : vector<4xf32> to vector<4x1xf32>
      %29 = math.sqrt %28 : vector<4x1xf32>
      %30 = arith.mulf %25, %25 : vector<4x32xf32>
      %cst_19 = arith.constant dense<0.000000e+00> : vector<4xf32>
      %31 = vector.multi_reduction <add>, %30, %cst_19 [1] : vector<4x32xf32> to vector<4xf32>
      %32 = vector.shape_cast %31 : vector<4xf32> to vector<4x1xf32>
      %33 = math.sqrt %32 : vector<4x1xf32>
      %cst_20 = arith.constant 1.000000e-10 : f32
      %34 = vector.broadcast %cst_20 : f32 to vector<4x1xf32>
      %35 = arith.maximumf %34, %29 : vector<4x1xf32>
      %cst_21 = arith.constant 1.000000e+01 : f32
      %36 = vector.broadcast %cst_21 : f32 to vector<4x1xf32>
      %37 = arith.subf %36, %33 : vector<4x1xf32>
      %cst_22 = arith.constant 0.000000e+00 : f32
      %38 = vector.broadcast %cst_22 : f32 to vector<4x1xf32>
      %39 = arith.maximumf %38, %37 : vector<4x1xf32>
      %40 = arith.addf %35, %39 : vector<4x1xf32>
      %cst_23 = arith.constant dense<0.000000e+00> : vector<1xf32>
      %41 = vector.multi_reduction <add>, %40, %cst_23 [0] : vector<4x1xf32> to vector<1xf32>
      %42 = vector.shape_cast %41 : vector<1xf32> to vector<1x1xf32>
      %cst_24 = arith.constant 2.500000e-01 : f32
      %43 = vector.broadcast %cst_24 : f32 to vector<1x1xf32>
      %44 = arith.mulf %42, %43 : vector<1x1xf32>
      %c0_25 = arith.constant 0 : index
      %c0_26 = arith.constant 0 : index
      %45 = vector.load %arg4[%c0_25, %c0_26] : memref<1x1xf32, #tpu.memory_space<vmem>>, vector<1x1xf32>
      tpu.vector_store %arg4[%c0_25, %c0_26], %44 {strides = array<i32>} : memref<1x1xf32, #tpu.memory_space<vmem>>, vector<1x1xf32>,
    } else {
    }
    %c0_i32_5 = arith.constant 0 : i32
    %11 = arith.cmpi sgt, %arg0, %c0_i32_5 : i32
    %12 = arith.extui %11 : i1 to i32
    %c0_i32_6 = arith.constant 0 : i32
    %13 = arith.cmpi ne, %12, %c0_i32_6 : i32
    scf.if %13 {
      %c0_9 = arith.constant 0 : index
      %c0_10 = arith.constant 0 : index
      %17 = vector.load %arg6[%c0_9, %c0_10] : memref<1x1xf32, #tpu.memory_space<vmem>>, vector<1x1xf32>
      %18 = arith.addf %17, %7 : vector<1x1xf32>
      %c0_11 = arith.constant 0 : index
      %c0_12 = arith.constant 0 : index
      %19 = vector.load %arg6[%c0_11, %c0_12] : memref<1x1xf32, #tpu.memory_space<vmem>>, vector<1x1xf32>
      tpu.vector_store %arg6[%c0_11, %c0_12], %18 {strides = array<i32>} : memref<1x1xf32, #tpu.memory_space<vmem>>, vector<1x1xf32>,
    } else {
    }
    %c0_i32_7 = arith.constant 0 : i32
    %14 = arith.cmpi eq, %arg0, %c0_i32_7 : i32
    %15 = arith.extui %14 : i1 to i32
    %c0_i32_8 = arith.constant 0 : i32
    %16 = arith.cmpi ne, %15, %c0_i32_8 : i32
    scf.if %16 {
      %c0_9 = arith.constant 0 : index
      %c0_10 = arith.constant 0 : index
      %17 = vector.load %arg6[%c0_9, %c0_10] : memref<1x1xf32, #tpu.memory_space<vmem>>, vector<1x1xf32>
      %cst_11 = arith.constant 4.8828125E-4 : f32
      %18 = vector.broadcast %cst_11 : f32 to vector<1x1xf32>
      %19 = arith.mulf %17, %18 : vector<1x1xf32>
      %c0_12 = arith.constant 0 : index
      %c0_13 = arith.constant 0 : index
      %20 = vector.load %arg5[%c0_12, %c0_13] : memref<1x1xf32, #tpu.memory_space<vmem>>, vector<1x1xf32>
      tpu.vector_store %arg5[%c0_12, %c0_13], %19 {strides = array<i32>} : memref<1x1xf32, #tpu.memory_space<vmem>>, vector<1x1xf32>,
    } else {
    }
    return
  }
  func.func @transform_0(%arg0: i32) -> (i32, i32, i32) {
    %c0_i32 = arith.constant 0 : i32
    %c0_i32_0 = arith.constant 0 : i32
    %c0_i32_1 = arith.constant 0 : i32
    %c0_i32_2 = arith.constant 0 : i32
    return %c0_i32, %c0_i32_0, %c0_i32_1 : i32, i32, i32
  }
  func.func @transform_1(%arg0: i32) -> (i32, i32) {
    %c0_i32 = arith.constant 0 : i32
    %c0_i32_0 = arith.constant 0 : i32
    return %arg0, %c0_i32 : i32, i32
  }
  func.func @transform_2(%arg0: i32) -> (i32, i32) {
    %c0_i32 = arith.constant 0 : i32
    %c0_i32_0 = arith.constant 0 : i32
    return %arg0, %c0_i32 : i32, i32
  }
  func.func @transform_3(%arg0: i32) -> (i32, i32) {
    %c0_i32 = arith.constant 0 : i32
    %c0_i32_0 = arith.constant 0 : i32
    %c0_i32_1 = arith.constant 0 : i32
    return %c0_i32, %c0_i32_0 : i32, i32
  }
  func.func @transform_4(%arg0: i32) -> (i32, i32) {
    %c0_i32 = arith.constant 0 : i32
    %c0_i32_0 = arith.constant 0 : i32
    %c0_i32_1 = arith.constant 0 : i32
    return %c0_i32, %c0_i32_0 : i32, i32
  }
}

</mosaic_0001>

<llo_original>
// kernel: tpu_custom_call.1
$region0: #{tpu_custom_call.1}
  #allocation0 [shape = 'u32[]', space=smem, size = 0x4, offset = 0x4, fixed_abs, tag = 'smem constant byte address 0x4 - core index']
  #allocation1 [shape = 'u32[144,128]{1,0:T(1,128)}', space=vmem, size = 0x12000, scoped, tag = 'internal scratch']
  #allocation2 [shape = 'f32[1,1]{1,0:T(1,128)}', space=vmem, size = 0x200, scoped, tag = 'scratch operand']
  %s0 = inlined_call_operand.hbm [shape: f32[3,4,32], index: 0, kind: input, shape index: {}]
  %s1 = inlined_call_operand.hbm [shape: f32[2,1024], index: 1, kind: input, shape index: {}]
  %s2 = inlined_call_operand.hbm [shape: f32[2,1024], index: 2, kind: input, shape index: {}]
  %s3 = inlined_call_operand.hbm [shape: f32[1,1], index: 3, kind: output, shape index: {0}]
  %s4 = inlined_call_operand.hbm [shape: f32[1,1], index: 4, kind: output, shape index: {1}]
  %5 = xla_tuple %s3, %s4
  %s6 = sld [smem:[#allocation0]]
  $region54: #{tpu_custom_call.1} parent=0
    _
  %s8 = ssub.s32 1, %s6
  %s9 = scalar_select 0, %s8, %s6
  $region1: #{tpu_custom_call.1} parent=0
    #allocation3 [shape = 'u8[6144]{0}', space=vmem, size = 0x1800, scoped, tag = 'input window, operand 0, single buffered']
    #allocation4 [shape = 's32[1]{0}', space=sflag, size = 0x4, scoped, tag = 'scoped memory for tpu_custom_call.1']
    #allocation5 [shape = 's32[1]{0}', space=sflag, size = 0x4, scoped, tag = 'scoped memory for tpu_custom_call.1']
    #allocation6 [shape = 'u8[8192]{0}', space=vmem, size = 0x2000, scoped, tag = 'input window, operand 1, single buffered']
    #allocation7 [shape = 's32[1]{0}', space=sflag, size = 0x4, scoped, tag = 'scoped memory for tpu_custom_call.1']
    #allocation8 [shape = 'u8[8192]{0}', space=vmem, size = 0x2000, scoped, tag = 'input window, operand 2, single buffered']
    #allocation9 [shape = 'u8[512]{0}', space=vmem, size = 0x400, scoped, tag = 'output window, operand 0, single buffered']
    #allocation10 [shape = 'u8[512]{0}', space=vmem, size = 0x400, scoped, tag = 'output window, operand 1, single buffered']
    #allocation11 [shape = 's32[1]{0}', space=sflag, size = 0x4, scoped, tag = 'scoped memory for tpu_custom_call.1']
    %10 = vsyncpa [#allocation4], 0
    %11 = vsyncpa [#allocation7], 0
    %12 = vsyncpa [#allocation5], 0
    %13 = vsyncpa [#allocation11], 0
    // Predicated region
    $region2: #{tpu_custom_call.1} parent=1 // pred_check
      _
    $region3: #{tpu_custom_call.1} parent=1 // pred_check_branch
      %15 = sbr.rel (0) target = $region5
    $region4: #{tpu_custom_call.1} parent=1 // pred_region
      %s17 = ssub.s32 192, 192
      %18 = vsyncadd [#allocation4], %s17
      %s19 = sshll.u32 [#allocation3], 4
      %s20 = int_to_ptr.vmem [resolvable:$true] %s19
      %25 = dma.hbm_to_vmem [thread:$0]  %s0, 192, %s20, [#allocation4], 64, 64, 4
    $region5: #{tpu_custom_call.1} parent=1 // pred_fallthru
      _
    // Predicated region
    $region6: #{tpu_custom_call.1} parent=1 // pred_check
      _
    $region7: #{tpu_custom_call.1} parent=1 // pred_check_branch
      %27 = sbr.rel (0) target = $region9
    $region8: #{tpu_custom_call.1} parent=1 // pred_region
      %s29 = ssub.s32 256, 256
      %30 = vsyncadd [#allocation7], %s29
      %s32 = sshll.u32 [#allocation6], 4
      %s33 = int_to_ptr.vmem [resolvable:$true] %s32
      %35 = dma.hbm_to_vmem [thread:$0]  %s1, 256, %s33, [#allocation7]
    $region9: #{tpu_custom_call.1} parent=1 // pred_fallthru
      _
    // Predicated region
    $region10: #{tpu_custom_call.1} parent=1 // pred_check
      _
    $region11: #{tpu_custom_call.1} parent=1 // pred_check_branch
      %37 = sbr.rel (0) target = $region13
    $region12: #{tpu_custom_call.1} parent=1 // pred_region
      %s39 = ssub.s32 256, 256
      %40 = vsyncadd [#allocation7], %s39
      %s42 = sshll.u32 [#allocation8], 4
      %s43 = int_to_ptr.vmem [resolvable:$true] %s42
      %45 = dma.hbm_to_vmem [thread:$0]  %s2, 256, %s43, [#allocation7]
    $region13: #{tpu_custom_call.1} parent=1 // pred_fallthru
      _
    // Predicated region
    $region14: #{tpu_custom_call.1} parent=1 // pred_check
      _
    $region15: #{tpu_custom_call.1} parent=1 // pred_check_branch
      %47 = sbr.rel (0) target = $region17
    $region16: #{tpu_custom_call.1} parent=1 // pred_region
      %48 = dma.done [#allocation4], 192
    $region17: #{tpu_custom_call.1} parent=1 // pred_fallthru
      _
    // Predicated region
    $region18: #{tpu_custom_call.1} parent=1 // pred_check
      _
    $region19: #{tpu_custom_call.1} parent=1 // pred_check_branch
      %50 = sbr.rel (0) target = $region21
    $region20: #{tpu_custom_call.1} parent=1 // pred_region
      %51 = dma.done [#allocation7], 256
    $region21: #{tpu_custom_call.1} parent=1 // pred_fallthru
      _
    // Predicated region
    $region22: #{tpu_custom_call.1} parent=1 // pred_check
      _
    $region23: #{tpu_custom_call.1} parent=1 // pred_check_branch
      %53 = sbr.rel (0) target = $region25
    $region24: #{tpu_custom_call.1} parent=1 // pred_region
      %54 = dma.done [#allocation7], 256
    $region25: #{tpu_custom_call.1} parent=1 // pred_fallthru
      _
    %v55 = vld [vmem:[#allocation6] sm:$0xff]
    %v56 = vld [vmem:[#allocation6 + $0x8] sm:$0xff]
    %v57 = vld [vmem:[#allocation8] sm:$0xff]
    %v58 = vld [vmem:[#allocation8 + $0x8] sm:$0xff]
    %v59 = vsub.f32 %v55, %v57
    %v60 = vsub.f32 %v56, %v58
    %v61 = vmul.f32 %v59, %v59
    %v62 = vmul.f32 %v60, %v60
    %v65 = vcombine.high %v61, %v61
    %v67 = vunpack.c.l.s4 1983009808
    %v68 = vunpack.c.0.s8 %v67
    %v69 = vlaneseq
    %v70 = vshrl.u32 %v69, 7
    %v71 = vsub.s32 %v68, %v70
    %v72 = vrot.slane %v61, %v71
    %v74 = vunpack.c.l.s4 1983009808
    %v75 = vunpack.c.0.s8 %v74
    %v76 = vlaneseq
    %v77 = vshrl.u32 %v76, 7
    %v78 = vsub.s32 %v75, %v77
    %v79 = vrot.slane %v65, %v78
    %v80 = vcombine.high %v72, %v72
    %v81 = vcombine.high %v79, %v79
    %v82 = vcombine.high %v62, %v62
    %v84 = vunpack.c.l.s4 1983009808
    %v85 = vunpack.c.0.s8 %v84
    %v86 = vlaneseq
    %v87 = vshrl.u32 %v86, 7
    %v88 = vsub.s32 %v85, %v87
    %v89 = vrot.slane %v62, %v88
    %v91 = vunpack.c.l.s4 1983009808
    %v92 = vunpack.c.0.s8 %v91
    %v93 = vlaneseq
    %v94 = vshrl.u32 %v93, 7
    %v95 = vsub.s32 %v92, %v94
    %v96 = vrot.slane %v82, %v95
    %v97 = vcombine.high %v89, %v89
    %v98 = vcombine.high %v96, %v96
    %vm107 = vcmask 1041408
    %v108 = vsel %vm107, %v72, 0.0
    %v109 = vsel %vm107, %v80, 0.0
    %v110 = vadd.f32 %v108, %v109
    %v111 = vsel %vm107, %v79, 0.0
    %v112 = vadd.f32 %v110, %v111
    %v113 = vsel %vm107, %v81, 0.0
    %v114 = vadd.f32 %v112, %v113
    %v115 = vsel %vm107, %v89, 0.0
    %v116 = vadd.f32 %v114, %v115
    %v117 = vsel %vm107, %v97, 0.0
    %v118 = vadd.f32 %v116, %v117
    %v119 = vsel %vm107, %v96, 0.0
    %v120 = vadd.f32 %v118, %v119
    %v121 = vsel %vm107, %v98, 0.0
    %v122 = vadd.f32 %v120, %v121
    %123 = vadd.xlane.f32.xlu0 %v122
    %v124 = vpop.xlane.xlu0 %123
    %v125 = vsel %vm107, %v124, 0.0
    %v126 = vrot.slane %v125, 4
    %v127 = vadd.f32 %v125, %v126
    %v128 = vrot.slane %v127, 2
    %v129 = vadd.f32 %v127, %v128
    %v130 = vrot.slane %v129, 1
    %v131 = vadd.f32 %v129, %v130
    %p132 = scmp.eq.s32.totalorder 0, 0
    // Predicated region
    $region26: #{tpu_custom_call.1} parent=1 // pred_check
      %p133 = pneg %p132
    $region27: #{tpu_custom_call.1} parent=1 // pred_check_branch
      %135 = sbr.rel (%p133) target = $region29
    $region28: #{tpu_custom_call.1} parent=1 // pred_region
      %vm136 = vcmask 0
      %137 = vst.msk [vmem:[#allocation2] sm:$0x1] %vm136, %v131
      %v138 = vld [vmem:[#allocation3] sm:$0xf]
      %s139 = scalar_lea.vmem [#allocation3], 4
      %v140 = vld [vmem:[%s139] sm:$0xf]
      %s141 = scalar_lea.vmem [#allocation3], 8
      %v142 = vld [vmem:[%s141] sm:$0xf]
      %v143 = vsub.f32 %v138, %v140
      %v144 = vsub.f32 %v138, %v142
      %v145 = vmul.f32 %v143, %v143
      %vm146 = vcmask 257024
      %v147 = vsel %vm146, %v145, 0.0
      %148 = vadd.xlane.f32.xlu0 %v147
      %v149 = vpop.xlane.xlu0 %148
      %v150 = vrsqrt.pop %v149
      %v151 = vmul.f32 %v149, %v150
      %vm152 = vcmp.eq.f32.partialorder %v149, inf
      %v153 = vsel %vm152, %v149, %v151
      %vm154 = vcmp.eq.f32.partialorder %v149, 0.0
      %v155 = vand.u32 %v149, 2147483648
      %v156 = vsel %vm154, %v155, %v153
      %v157 = vmul.f32 %v144, %v144
      %v158 = vsel %vm146, %v157, 0.0
      %159 = vadd.xlane.f32.xlu0 %v158
      %v160 = vpop.xlane.xlu0 %159
      %v161 = vrsqrt.pop %v160
      %v162 = vmul.f32 %v160, %v161
      %vm163 = vcmp.eq.f32.partialorder %v160, inf
      %v164 = vsel %vm163, %v160, %v162
      %vm165 = vcmp.eq.f32.partialorder %v160, 0.0
      %v166 = vand.u32 %v160, 2147483648
      %v167 = vsel %vm165, %v166, %v164
      %v168 = vmax.f32 %v156, 1e-10
      %v169 = vsub.f32 10.0, %v167
      %v170 = vmax.f32 %v169, 0.0
      %v171 = vadd.f32 %v168, %v170
      %vm172 = vcmask 1043456
      %v173 = vsel %vm172, %v171, 0.0
      %v174 = vrot.slane %v173, 4
      %v175 = vadd.f32 %v173, %v174
      %v176 = vrot.slane %v175, 2
      %v177 = vadd.f32 %v175, %v176
      %v178 = vrot.slane %v177, 1
      %v179 = vadd.f32 %v177, %v178
      %v180 = vmul.f32 %v179, 0.25
      %181 = vst.msk [vmem:[#allocation9] sm:$0x1] %vm136, %v180
    $region29: #{tpu_custom_call.1} parent=1 // pred_fallthru
      _
    %p182 = scmp.gt.s32.totalorder 0, 0
    // Predicated region
    $region30: #{tpu_custom_call.1} parent=1 // pred_check
      %p183 = pneg %p182
    $region31: #{tpu_custom_call.1} parent=1 // pred_check_branch
      %185 = sbr.rel (%p183) target = $region33
    $region32: #{tpu_custom_call.1} parent=1 // pred_region
      %v186 = vld [vmem:[#allocation2] sm:$0x1]
      %v187 = vadd.f32 %v186, %v131
      %vm188 = vcmask 0
      %189 = vst.msk [vmem:[#allocation2] sm:$0x1] %vm188, %v187
    $region33: #{tpu_custom_call.1} parent=1 // pred_fallthru
      _
    // Predicated region
    $region34: #{tpu_custom_call.1} parent=1 // pred_check
      %p190 = pneg %p132
    $region35: #{tpu_custom_call.1} parent=1 // pred_check_branch
      %192 = sbr.rel (%p190) target = $region37
    $region36: #{tpu_custom_call.1} parent=1 // pred_region
      %v193 = vld [vmem:[#allocation2] sm:$0x1]
      %v194 = vmul.f32 %v193, 0.00048828125
      %vm195 = vcmask 0
      %196 = vst.msk [vmem:[#allocation10] sm:$0x1] %vm195, %v194
    $region37: #{tpu_custom_call.1} parent=1 // pred_fallthru
      _
    // Predicated region
    $region38: #{tpu_custom_call.1} parent=1 // pred_check
      _
    $region39: #{tpu_custom_call.1} parent=1 // pred_check_branch
      %198 = sbr.rel (0) target = $region41
    $region40: #{tpu_custom_call.1} parent=1 // pred_region
      %s200 = ssub.s32 16, 16
      %201 = vsyncadd [#allocation5], %s200
      %s203 = sshll.u32 [#allocation9], 4
      %s204 = int_to_ptr.vmem [resolvable:$true] %s203
      %206 = dma.vmem_to_hbm [thread:$0]  %s204, 16, %s3, [#allocation5]
    $region41: #{tpu_custom_call.1} parent=1 // pred_fallthru
      _
    // Predicated region
    $region42: #{tpu_custom_call.1} parent=1 // pred_check
      _
    $region43: #{tpu_custom_call.1} parent=1 // pred_check_branch
      %208 = sbr.rel (0) target = $region45
    $region44: #{tpu_custom_call.1} parent=1 // pred_region
      %s210 = ssub.s32 16, 16
      %211 = vsyncadd [#allocation11], %s210
      %s213 = sshll.u32 [#allocation10], 4
      %s214 = int_to_ptr.vmem [resolvable:$true] %s213
      %216 = dma.vmem_to_hbm [thread:$0]  %s214, 16, %s4, [#allocation11]
    $region45: #{tpu_custom_call.1} parent=1 // pred_fallthru
      _
    // Predicated region
    $region46: #{tpu_custom_call.1} parent=1 // pred_check
      _
    $region47: #{tpu_custom_call.1} parent=1 // pred_check_branch
      %218 = sbr.rel (0) target = $region49
    $region48: #{tpu_custom_call.1} parent=1 // pred_region
      %219 = dma.done [#allocation5], 16
    $region49: #{tpu_custom_call.1} parent=1 // pred_fallthru
      _
    // Predicated region
    $region50: #{tpu_custom_call.1} parent=1 // pred_check
      _
    $region51: #{tpu_custom_call.1} parent=1 // pred_check_branch
      %221 = sbr.rel (0) target = $region53
    $region52: #{tpu_custom_call.1} parent=1 // pred_region
      %222 = dma.done [#allocation11], 16
    $region53: #{tpu_custom_call.1} parent=1 // pred_fallthru
      _
    %223 = vsyncpa [#allocation4], 1
    %224 = vsyncpa [#allocation7], 1
    %225 = vsyncpa [#allocation5], 1
    %226 = vsyncpa [#allocation11], 1

</llo_original>
